<compile_context>
chip_gen: v6e
topology: v6e:2x2x1
jax: 0.10.0
libtpu: 0.0.40
codegen_flags: <defaults>
</compile_context>

<pallas_src>
import functools

import jax
import jax.numpy as jnp
import numpy as np
from jax.experimental import pallas as pl
from jax.experimental.pallas import tpu as pltpu


def _soft_ce_kernel(logits_ref, target_ref, out_ref, acc_ref, *,
                    n_total, n_classes, block_rows, blocks_per_core,
                    smooth_factor, ignore_index):
    core = pl.program_id(0)   # "parallel" axis (split across TCs on v7x)
    j = pl.program_id(1)      # "arbitrary" row-block (reduction) axis

    @pl.when(j == 0)
    def _():
        acc_ref[...] = jnp.zeros_like(acc_ref)

    x = logits_ref[...].astype(jnp.float32)          # (TM, C); bf16 in -> f32 math
    t = target_ref[...]                              # (TM, 1) int32

    # Row statistics of log_softmax WITHOUT materializing lprobs:
    #   lprobs = x - m - lse
    #   nll    = -lprobs[t]     = (m + lse) - x[t]
    #   smooth = -sum_c lprobs  = C*(m + lse) - sum_c x
    m = jnp.max(x, axis=1, keepdims=True)                           # (TM, 1)
    lse = jnp.log(jnp.sum(jnp.exp(x - m), axis=1, keepdims=True))   # (TM, 1)
    sum_x = jnp.sum(x, axis=1, keepdims=True)                       # (TM, 1)

    pad = t == ignore_index                                         # (TM, 1)
    t_safe = jnp.where(pad, 0, t)                                   # masked_fill(pad, 0)
    col = jax.lax.broadcasted_iota(jnp.int32, x.shape, 1)           # (TM, C)
    x_t = jnp.sum(jnp.where(col == t_safe, x, 0.0), axis=1, keepdims=True)

    logz = m + lse
    nll = logz - x_t
    smooth = float(n_classes) * logz - sum_x

    eps = float(smooth_factor)
    eps_i = eps / float(n_classes)
    row_loss = (1.0 - eps) * nll + eps_i * smooth                   # (TM, 1)

    # Mask ignore_index rows and rows beyond the logical batch end (the grid
    # is cdiv-padded; trailing blocks may hold garbage / duplicated rows).
    row0 = (core * blocks_per_core + j) * block_rows
    row_iota = jax.lax.broadcasted_iota(jnp.int32, (block_rows, 1), 0)
    valid = jnp.logical_and(jnp.logical_not(pad), (row0 + row_iota) < n_total)
    acc_ref[...] += jnp.where(valid, row_loss, 0.0)

    # Epilogue once per core: reduce per-row partials, write this core's sum.
    @pl.when(j == pl.num_programs(1) - 1)
    def _():
        out_ref[...] = jnp.sum(acc_ref[...], axis=0,
                               keepdims=True).reshape(1, 1, 1)


def _choose_block_rows(n, c, in_itemsize, num_cores,
                       tile_budget_bytes=16 * 1024 * 1024):
    """Largest row tile that keeps the double-buffered input + f32 temps
    comfortably inside the scoped VMEM budget (works for v5e/v6e/v7x)."""
    # Per row: 2x (double-buffered) input tile + ~2 full-width f32 temporaries.
    bytes_per_row = c * (2 * in_itemsize + 2 * 4) + 64
    rows = max(8, tile_budget_bytes // bytes_per_row)
    rows = min(rows, 1024)
    # No point tiling beyond this core's share of rows (rounded to sublanes).
    rows_per_core = -(-n // num_cores)
    rows = min(rows, -(-rows_per_core // 8) * 8)
    return max(8, (rows // 8) * 8)


def soft_cross_entropy_loss(logits, target, *, smooth_factor=0.0,
                            ignore_index=-100, block_rows=None, num_cores=2):
    """Pallas implementation of SoftCrossEntropyLoss(reduction='mean', dim=1)."""
    n, c = logits.shape
    if block_rows is None:
        block_rows = _choose_block_rows(n, c, logits.dtype.itemsize, num_cores)
    target_2d = target.reshape(n, 1).astype(jnp.int32)

    n_blocks = pl.cdiv(n, block_rows)
    blocks_per_core = pl.cdiv(n_blocks, num_cores)

    def row_block_index(core, j):
        # Clamp so padded grid steps map to a real block; their rows are
        # masked inside the kernel by the global-row bound.
        return jnp.minimum(core * blocks_per_core + j, n_blocks - 1)

    kernel = functools.partial(
        _soft_ce_kernel,
        n_total=n, n_classes=c, block_rows=block_rows,
        blocks_per_core=blocks_per_core,
        smooth_factor=smooth_factor, ignore_index=ignore_index)

    partial_sums = pl.pallas_call(
        kernel,
        out_shape=jax.ShapeDtypeStruct((num_cores, 1, 1), jnp.float32),
        grid_spec=pltpu.PrefetchScalarGridSpec(
            num_scalar_prefetch=0,
            grid=(num_cores, blocks_per_core),
            in_specs=[
                pl.BlockSpec((block_rows, c),
                             lambda core, j: (row_block_index(core, j), 0)),
                pl.BlockSpec((block_rows, 1),
                             lambda core, j: (row_block_index(core, j), 0)),
            ],
            out_specs=pl.BlockSpec((1, 1, 1), lambda core, j: (core, 0, 0)),
            scratch_shapes=[
                pltpu.VMEM((block_rows, 1), jnp.float32),  # per-row loss acc
            ],
        ),
        compiler_params=pltpu.CompilerParams(
            dimension_semantics=("parallel", "arbitrary"),
            vmem_limit_bytes=32 * 1024 * 1024),
    )(logits, target_2d)

    # reduction='mean' divides by TOTAL rows (fairseq semantics: ignored rows
    # still count in the denominator).
    return jnp.sum(partial_sums) / float(n)


def _reference_loss(logits, target, smooth_factor, ignore_index):
    """Pure-JAX replica of label_smoothed_nll_loss(reduction='mean', dim=1)."""
    lp = jax.nn.log_softmax(logits.astype(jnp.float32), axis=1)
    t = target.reshape(-1, 1)
    pad = t == ignore_index
    t_safe = jnp.where(pad, 0, t)
    nll = -jnp.take_along_axis(lp, t_safe, axis=1)
    smooth = -jnp.sum(lp, axis=1, keepdims=True)
    nll = jnp.where(pad, 0.0, nll)
    smooth = jnp.where(pad, 0.0, smooth)
    eps = smooth_factor
    return (1.0 - eps) * jnp.mean(nll) + (eps / logits.shape[1]) * jnp.mean(smooth)


if __name__ == "__main__":
    key = jax.random.PRNGKey(0)
    k_logits, k_tgt = jax.random.split(key)

    smooth_factor = 0.1
    ignore_index = -100

    # Small classification problem: 16 rows, 16 classes.
    N, C = 16, 16
    logits = jax.random.normal(k_logits, (N, C), dtype=jnp.float32)
    target = jax.random.randint(k_tgt, (N,), 0, C, dtype=jnp.int32)
    target = target.at[3].set(ignore_index)   # exercise ignore_index masking

    loss = soft_cross_entropy_loss(logits, target,
                                   smooth_factor=smooth_factor,
                                   ignore_index=ignore_index)
    loss = jax.block_until_ready(loss)
    ref = _reference_loss(logits, target, smooth_factor, ignore_index)
    np.testing.assert_allclose(np.asarray(loss), np.asarray(ref),
                               rtol=1e-5, atol=1e-6)

    # Ragged batch (N not a multiple of the row tile) exercises the in-kernel
    # valid-row mask — no host-side padding requirement.
    N2 = 13
    logits2 = jax.random.normal(k_logits, (N2, C), dtype=jnp.float32)
    target2 = jax.random.randint(k_tgt, (N2,), 0, C, dtype=jnp.int32)
    loss2 = jax.block_until_ready(
        soft_cross_entropy_loss(logits2, target2,
                                smooth_factor=smooth_factor,
                                ignore_index=ignore_index))
    ref2 = _reference_loss(logits2, target2, smooth_factor, ignore_index)
    np.testing.assert_allclose(np.asarray(loss2), np.asarray(ref2),
                               rtol=1e-5, atol=1e-6)

    print("KERNEL_OK")
</pallas_src>

<mosaic_0001>
module attributes {stable_mosaic.version = 11 : i64} {
  func.func @_soft_ce_kernel(%arg0: i32, %arg1: i32, %arg2: memref<8x16xf32, #tpu.memory_space<vmem>>, %arg3: memref<8x1xi32, #tpu.memory_space<vmem>>, %arg4: memref<1x1x1xf32, #tpu.memory_space<vmem>>, %arg5: memref<8x1xf32, #tpu.memory_space<vmem>>) attributes {dimension_semantics = [#tpu.dimension_semantics<parallel>, #tpu.dimension_semantics<arbitrary>], iteration_bounds = array<i64: 2, 1>, scalar_prefetch = 0 : i64, scratch_operands = 1 : i64, tpu.core_type = #tpu.core_type<tc>, window_params = [{transform_indices = @transform_0, window_bounds = array<i64: 8, 16>}, {transform_indices = @transform_1, window_bounds = array<i64: 8, 1>}, {transform_indices = @transform_2, window_bounds = array<i64: 1, 1, 1>}]} {
    %c0_i32 = arith.constant 0 : i32
    %0 = arith.cmpi eq, %arg1, %c0_i32 : i32
    %1 = arith.extui %0 : i1 to i32
    %c0_i32_0 = arith.constant 0 : i32
    %2 = arith.cmpi ne, %1, %c0_i32_0 : i32
    scf.if %2 {
      %cst_20 = arith.constant 0.000000e+00 : f32
      %54 = vector.broadcast %cst_20 : f32 to vector<8x1xf32>
      %c0_21 = arith.constant 0 : index
      %c0_22 = arith.constant 0 : index
      %55 = vector.load %arg5[%c0_21, %c0_22] : memref<8x1xf32, #tpu.memory_space<vmem>>, vector<8x1xf32>
      tpu.vector_store %arg5[%c0_21, %c0_22], %54 {strides = array<i32>} : memref<8x1xf32, #tpu.memory_space<vmem>>, vector<8x1xf32>,
    } else {
    }
    %c0 = arith.constant 0 : index
    %c0_1 = arith.constant 0 : index
    %3 = vector.load %arg2[%c0, %c0_1] : memref<8x16xf32, #tpu.memory_space<vmem>>, vector<8x16xf32>
    %c0_2 = arith.constant 0 : index
    %c0_3 = arith.constant 0 : index
    %4 = vector.load %arg3[%c0_2, %c0_3] : memref<8x1xi32, #tpu.memory_space<vmem>>, vector<8x1xi32>
    %cst = arith.constant dense<0xFF800000> : vector<8xf32>
    %5 = vector.multi_reduction <maximumf>, %3, %cst [1] : vector<8x16xf32> to vector<8xf32>
    %6 = vector.shape_cast %5 : vector<8xf32> to vector<8x1xf32>
    %7 = vector.broadcast %6 : vector<8x1xf32> to vector<8x16xf32>
    %8 = arith.subf %3, %7 : vector<8x16xf32>
    %9 = math.exp %8 : vector<8x16xf32>
    %cst_4 = arith.constant dense<0.000000e+00> : vector<8xf32>
    %10 = vector.multi_reduction <add>, %9, %cst_4 [1] : vector<8x16xf32> to vector<8xf32>
    %11 = vector.shape_cast %10 : vector<8xf32> to vector<8x1xf32>
    %12 = math.log %11 : vector<8x1xf32>
    %cst_5 = arith.constant dense<0.000000e+00> : vector<8xf32>
    %13 = vector.multi_reduction <add>, %3, %cst_5 [1] : vector<8x16xf32> to vector<8xf32>
    %14 = vector.shape_cast %13 : vector<8xf32> to vector<8x1xf32>
    %c-100_i32 = arith.constant -100 : i32
    %15 = vector.broadcast %c-100_i32 : i32 to vector<8x1xi32>
    %16 = arith.cmpi eq, %4, %15 : vector<8x1xi32>
    %c0_i32_6 = arith.constant 0 : i32
    %17 = vector.broadcast %c0_i32_6 : i32 to vector<8x1xi32>
    %18 = arith.select %16, %17, %4 : vector<8x1xi1>, vector<8x1xi32>
    %19 = tpu.iota {dimensions = array<i32: 1>} : vector<8x16xi32>
    %20 = vector.broadcast %18 : vector<8x1xi32> to vector<8x16xi32>
    %21 = arith.cmpi eq, %19, %20 : vector<8x16xi32>
    %cst_7 = arith.constant 0.000000e+00 : f32
    %22 = vector.broadcast %cst_7 : f32 to vector<8x16xf32>
    %23 = arith.select %21, %3, %22 : vector<8x16xi1>, vector<8x16xf32>
    %cst_8 = arith.constant dense<0.000000e+00> : vector<8xf32>
    %24 = vector.multi_reduction <add>, %23, %cst_8 [1] : vector<8x16xf32> to vector<8xf32>
    %25 = vector.shape_cast %24 : vector<8xf32> to vector<8x1xf32>
    %26 = arith.addf %6, %12 : vector<8x1xf32>
    %27 = arith.subf %26, %25 : vector<8x1xf32>
    %cst_9 = arith.constant 1.600000e+01 : f32
    %28 = vector.broadcast %cst_9 : f32 to vector<8x1xf32>
    %29 = arith.mulf %28, %26 : vector<8x1xf32>
    %30 = arith.subf %29, %14 : vector<8x1xf32>
    %cst_10 = arith.constant 0.899999976 : f32
    %31 = vector.broadcast %cst_10 : f32 to vector<8x1xf32>
    %32 = arith.mulf %31, %27 : vector<8x1xf32>
    %cst_11 = arith.constant 6.250000e-03 : f32
    %33 = vector.broadcast %cst_11 : f32 to vector<8x1xf32>
    %34 = arith.mulf %33, %30 : vector<8x1xf32>
    %35 = arith.addf %32, %34 : vector<8x1xf32>
    %c1_i32 = arith.constant 1 : i32
    %36 = arith.muli %arg0, %c1_i32 : i32
    %37 = arith.addi %36, %arg1 : i32
    %c8_i32 = arith.constant 8 : i32
    %38 = arith.muli %37, %c8_i32 : i32
    %39 = tpu.iota {dimensions = array<i32: 0>} : vector<8x1xi32>
    %cst_12 = arith.constant dense<true> : vector<8x1xi1>
    %40 = arith.xori %16, %cst_12 : vector<8x1xi1>
    %41 = vector.broadcast %38 : i32 to vector<8x1xi32>
    %42 = arith.addi %41, %39 : vector<8x1xi32>
    %c16_i32 = arith.constant 16 : i32
    %43 = vector.broadcast %c16_i32 : i32 to vector<8x1xi32>
    %44 = arith.cmpi slt, %42, %43 : vector<8x1xi32>
    %45 = arith.andi %40, %44 : vector<8x1xi1>
    %c0_13 = arith.constant 0 : index
    %c0_14 = arith.constant 0 : index
    %46 = vector.load %arg5[%c0_13, %c0_14] : memref<8x1xf32, #tpu.memory_space<vmem>>, vector<8x1xf32>
    %cst_15 = arith.constant 0.000000e+00 : f32
    %47 = vector.broadcast %cst_15 : f32 to vector<8x1xf32>
    %48 = arith.select %45, %35, %47 : vector<8x1xi1>, vector<8x1xf32>
    %49 = arith.addf %46, %48 : vector<8x1xf32>
    %c0_16 = arith.constant 0 : index
    %c0_17 = arith.constant 0 : index
    %50 = vector.load %arg5[%c0_16, %c0_17] : memref<8x1xf32, #tpu.memory_space<vmem>>, vector<8x1xf32>
    tpu.vector_store %arg5[%c0_16, %c0_17], %49 {strides = array<i32>} : memref<8x1xf32, #tpu.memory_space<vmem>>, vector<8x1xf32>,
    %c0_i32_18 = arith.constant 0 : i32
    %51 = arith.cmpi eq, %arg1, %c0_i32_18 : i32
    %52 = arith.extui %51 : i1 to i32
    %c0_i32_19 = arith.constant 0 : i32
    %53 = arith.cmpi ne, %52, %c0_i32_19 : i32
    scf.if %53 {
      %c0_20 = arith.constant 0 : index
      %c0_21 = arith.constant 0 : index
      %54 = vector.load %arg5[%c0_20, %c0_21] : memref<8x1xf32, #tpu.memory_space<vmem>>, vector<8x1xf32>
      %cst_22 = arith.constant dense<0.000000e+00> : vector<1xf32>
      %55 = vector.multi_reduction <add>, %54, %cst_22 [0] : vector<8x1xf32> to vector<1xf32>
      %56 = vector.shape_cast %55 : vector<1xf32> to vector<1x1xf32>
      %57 = vector.shape_cast %56 : vector<1x1xf32> to vector<1x1x1xf32>
      %c0_23 = arith.constant 0 : index
      %c0_24 = arith.constant 0 : index
      %c0_25 = arith.constant 0 : index
      %58 = vector.load %arg4[%c0_23, %c0_24, %c0_25] : memref<1x1x1xf32, #tpu.memory_space<vmem>>, vector<1x1x1xf32>
      tpu.vector_store %arg4[%c0_23, %c0_24, %c0_25], %57 {strides = array<i32>} : memref<1x1x1xf32, #tpu.memory_space<vmem>>, vector<1x1x1xf32>,
    } else {
    }
    return
  }
  func.func @transform_0(%arg0: i32, %arg1: i32) -> (i32, i32) {
    %c1_i32 = arith.constant 1 : i32
    %0 = arith.muli %arg0, %c1_i32 : i32
    %1 = arith.addi %0, %arg1 : i32
    %c1_i32_0 = arith.constant 1 : i32
    %2 = arith.minsi %1, %c1_i32_0 : i32
    %c0_i32 = arith.constant 0 : i32
    %c0_i32_1 = arith.constant 0 : i32
    return %2, %c0_i32 : i32, i32
  }
  func.func @transform_1(%arg0: i32, %arg1: i32) -> (i32, i32) {
    %c1_i32 = arith.constant 1 : i32
    %0 = arith.muli %arg0, %c1_i32 : i32
    %1 = arith.addi %0, %arg1 : i32
    %c1_i32_0 = arith.constant 1 : i32
    %2 = arith.minsi %1, %c1_i32_0 : i32
    %c0_i32 = arith.constant 0 : i32
    %c0_i32_1 = arith.constant 0 : i32
    return %2, %c0_i32 : i32, i32
  }
  func.func @transform_2(%arg0: i32, %arg1: i32) -> (i32, i32, i32) {
    %c0_i32 = arith.constant 0 : i32
    %c0_i32_0 = arith.constant 0 : i32
    %c0_i32_1 = arith.constant 0 : i32
    return %arg0, %c0_i32, %c0_i32_0 : i32, i32, i32
  }
}

</mosaic_0001>

<llo_original>
// kernel: tpu_custom_call.1
$region0: #{tpu_custom_call.1}
  #allocation0 [shape = 'u32[]', space=smem, size = 0x4, offset = 0x4, fixed_abs, tag = 'smem constant byte address 0x4 - core index']
  #allocation1 [shape = 'u32[144,128]{1,0:T(1,128)}', space=vmem, size = 0x12000, scoped, tag = 'internal scratch']
  #allocation2 [shape = 'f32[8,1]{1,0:T(8,128)}', space=vmem, size = 0x1000, scoped, tag = 'scratch operand']
  %s0 = inlined_call_operand.vmem [shape: f32[16,16], index: 0, kind: input, shape index: {}]
  %s1 = inlined_call_operand.vmem [shape: s32[16,1], index: 1, kind: input, shape index: {}]
  %s2 = inlined_call_operand.vmem [shape: f32[2,1,1], index: 2, kind: output, shape index: {}]
  %s3 = sld [smem:[#allocation0]]
  $region49: #{tpu_custom_call.1} parent=0
    _
  %s5 = ssub.s32 1, %s3
  %s6 = scalar_select 0, %s5, %s3
  loop: start=0, step=1, limit=4
  $region2: #{tpu_custom_call.1} parent=0 // loop_pre_header
    _
  $region3: #{tpu_custom_call.1} parent=0 // loop_header
    %s8 = sphi 0, %s12
    %p9 = scmp.ge.s32.totalorder %s8, 4
    %s15 = sphi 0, %s27
    %s16 = sphi 0, %s23
    %s17 = sphi 0, %s15
    %s18 = sphi 0, %s16
    %s19 = sphi 0, %s17
    %s20 = sphi 0, %s18
    %s36 = sphi 0, %s38
    %s39 = sphi 0, %s36
    %s40 = sphi 0, %s39
    %s56 = sphi 0, %s40
    %s68 = sphi 0, %s70
    %s71 = sphi 0, %s68
    %s72 = sphi 0, %s71
    %s88 = sphi 0, %s72
    %s94 = sphi 0, %s96
    %s97 = sphi 0, %s94
    %s98 = sphi 0, %s97
    %s114 = sphi 0, %s98
  $region4: #{tpu_custom_call.1} parent=0 // loop_header_branch
    %11 = sbr.rel (%p9) target = $region8
  $region5: #{tpu_custom_call.1} parent=0 // loop_body
    %s13 = ssub.s32 %s8, 1
    %s14 = ssub.s32 %s8, 2
    %s21 = sadd.s32 1, %s16
    %p22 = scmp.ge.s32.totalorder %s21, 1
    %s23 = scalar_select %p22, 0, %s21
    %s24 = sadd.s32 1, %s15
    %s25 = scalar_select %p22, %s24, %s15
    %p26 = scmp.ge.s32.totalorder %s25, 2
    %s27 = scalar_select %p26, 0, %s25
    %s28 = sadd.s32 %s15, %s16
    %p29 = scmp.lt.s32.totalorder %s28, 1
    %s30 = scalar_select %p29, %s28, 1
    %s31 = sadd.s32 %s27, %s23
    %p32 = scmp.lt.s32.totalorder %s31, 1
    %s33 = scalar_select %p32, %s31, 1
    %s34 = ssub.s32 %s30, %s33
    %p35 = scmp.eq.s32.totalorder %s34, 0
    %s37 = sadd.s32 %s36, 1
    %s38 = scalar_select %p35, %s36, %s37
    %p41 = pneg %p35
    %p42 = scmp.eq.s32.totalorder %s8, 1
    %p43 = por %p41, %p42
    %p44 = scmp.ne.s32.totalorder %s36, %s39
    %p45 = scmp.eq.s32.totalorder %s8, 0
    %p46 = por %p44, %p45
    %p47 = scmp.ne.s32.totalorder %s36, %s39
    %p48 = scmp.eq.s32.totalorder %s13, 1
    %p49 = por %p47, %p48
    %p50 = scmp.ne.s32.totalorder %s39, %s40
    %p51 = scmp.eq.s32.totalorder %s13, 0
    %p52 = por %p50, %p51
    %p53 = scmp.ne.s32.totalorder %s39, %s40
    %p54 = scmp.eq.s32.totalorder %s14, 1
    %p55 = por %p53, %p54
    %p57 = scmp.ne.s32.totalorder %s40, %s56
    %p58 = scmp.eq.s32.totalorder %s14, 0
    %p59 = por %p57, %p58
    %s60 = sadd.s32 %s15, %s16
    %p61 = scmp.lt.s32.totalorder %s60, 1
    %s62 = scalar_select %p61, %s60, 1
    %s63 = sadd.s32 %s27, %s23
    %p64 = scmp.lt.s32.totalorder %s63, 1
    %s65 = scalar_select %p64, %s63, 1
    %s66 = ssub.s32 %s62, %s65
    %p67 = scmp.eq.s32.totalorder %s66, 0
    %s69 = sadd.s32 %s68, 1
    %s70 = scalar_select %p67, %s68, %s69
    %p73 = pneg %p67
    %p74 = scmp.eq.s32.totalorder %s8, 1
    %p75 = por %p73, %p74
    %p76 = scmp.ne.s32.totalorder %s68, %s71
    %p77 = scmp.eq.s32.totalorder %s8, 0
    %p78 = por %p76, %p77
    %p79 = scmp.ne.s32.totalorder %s68, %s71
    %p80 = scmp.eq.s32.totalorder %s13, 1
    %p81 = por %p79, %p80
    %p82 = scmp.ne.s32.totalorder %s71, %s72
    %p83 = scmp.eq.s32.totalorder %s13, 0
    %p84 = por %p82, %p83
    %p85 = scmp.ne.s32.totalorder %s71, %s72
    %p86 = scmp.eq.s32.totalorder %s14, 1
    %p87 = por %p85, %p86
    %p89 = scmp.ne.s32.totalorder %s72, %s88
    %p90 = scmp.eq.s32.totalorder %s14, 0
    %p91 = por %p89, %p90
    %s92 = ssub.s32 %s15, %s27
    %p93 = scmp.eq.s32.totalorder %s92, 0
    %s95 = sadd.s32 %s94, 1
    %s96 = scalar_select %p93, %s94, %s95
    %p99 = pneg %p93
    %p100 = scmp.eq.s32.totalorder %s8, 1
    %p101 = por %p99, %p100
    %p102 = scmp.ne.s32.totalorder %s94, %s97
    %p103 = scmp.eq.s32.totalorder %s8, 0
    %p104 = por %p102, %p103
    %p105 = scmp.ne.s32.totalorder %s94, %s97
    %p106 = scmp.eq.s32.totalorder %s13, 1
    %p107 = por %p105, %p106
    %p108 = scmp.ne.s32.totalorder %s97, %s98
    %p109 = scmp.eq.s32.totalorder %s13, 0
    %p110 = por %p108, %p109
    %p111 = scmp.ne.s32.totalorder %s97, %s98
    %p112 = scmp.eq.s32.totalorder %s14, 1
    %p113 = por %p111, %p112
    %p115 = scmp.ne.s32.totalorder %s98, %s114
    %p116 = scmp.eq.s32.totalorder %s14, 0
    %p117 = por %p115, %p116
    %p118 = scmp.le.s32.totalorder 1, %s8
    %p119 = scmp.lt.s32.totalorder %s8, 3
    %p120 = pnand %p118, %p119
    %p121 = pneg %p120
    // Predicated region
    $region9: #{tpu_custom_call.1} parent=5 // pred_check
      _
    $region10: #{tpu_custom_call.1} parent=5 // pred_check_branch
      %123 = sbr.rel (%p120) target = $region12
    $region11: #{tpu_custom_call.1} parent=5 // pred_region
      %s124 = ssub.s32 %s8, 1
    $region12: #{tpu_custom_call.1} parent=5 // pred_fallthru
      _
    %p125 = scmp.lt.s32.totalorder %s8, 2
    // Predicated region
    $region13: #{tpu_custom_call.1} parent=5 // pred_check
      %p126 = pneg %p125
    $region14: #{tpu_custom_call.1} parent=5 // pred_check_branch
      %128 = sbr.rel (%p126) target = $region16
    $region15: #{tpu_custom_call.1} parent=5 // pred_region
      // Predicated region
      $region17: #{tpu_custom_call.1} parent=15 // pred_check
        %p129 = pneg %p46
      $region18: #{tpu_custom_call.1} parent=15 // pred_check_branch
        %131 = sbr.rel (%p129) target = $region20
      $region19: #{tpu_custom_call.1} parent=15 // pred_region
        %s132 = sadd.s32 %s15, %s16
        %p133 = scmp.lt.s32.totalorder %s132, 1
        %s134 = scalar_select %p133, %s132, 1
        %p135 = scmp.lt.s32.totalorder %s134, 1
        %s136 = scalar_select %p135, %s134, 1
        %s137 = smul.addr %s136, 8
        %s138 = scalar_lea.vmem %s0, %s137
        %s139 = sadd.s32 %s15, %s16
        %p140 = scmp.lt.s32.totalorder %s139, 1
        %s141 = scalar_select %p140, %s139, 1
      $region20: #{tpu_custom_call.1} parent=15 // pred_fallthru
        _
      // Predicated region
      $region21: #{tpu_custom_call.1} parent=15 // pred_check
        %p142 = pneg %p78
      $region22: #{tpu_custom_call.1} parent=15 // pred_check_branch
        %144 = sbr.rel (%p142) target = $region24
      $region23: #{tpu_custom_call.1} parent=15 // pred_region
        %s145 = sadd.s32 %s15, %s16
        %p146 = scmp.lt.s32.totalorder %s145, 1
        %s147 = scalar_select %p146, %s145, 1
        %p148 = scmp.lt.s32.totalorder %s147, 1
        %s149 = scalar_select %p148, %s147, 1
        %s150 = smul.addr %s149, 8
        %s151 = scalar_lea.vmem %s1, %s150
        %s152 = sadd.s32 %s15, %s16
        %p153 = scmp.lt.s32.totalorder %s152, 1
        %s154 = scalar_select %p153, %s152, 1
      $region24: #{tpu_custom_call.1} parent=15 // pred_fallthru
        _
    $region16: #{tpu_custom_call.1} parent=5 // pred_fallthru
      _
    %p155 = scmp.le.s32.totalorder 1, %s8
    %p156 = scmp.lt.s32.totalorder %s8, 3
    %p157 = pnand %p155, %p156
    %p158 = pneg %p157
    // Predicated region
    $region25: #{tpu_custom_call.1} parent=5 // pred_check
      _
    $region26: #{tpu_custom_call.1} parent=5 // pred_check_branch
      %160 = sbr.rel (%p157) target = $region28
    $region27: #{tpu_custom_call.1} parent=5 // pred_region
      %s161 = ssub.s32 %s8, 1
      %s162 = sadd.s32 %s17, %s18
      %p163 = scmp.lt.s32.totalorder %s162, 1
      %s164 = scalar_select %p163, %s162, 1
      %p165 = scmp.lt.s32.totalorder %s164, 1
      %s166 = scalar_select %p165, %s164, 1
      %s167 = smul.addr %s166, 8
      %s168 = scalar_lea.vmem %s0, %s167
      %p169 = pneg %p52
      %p170 = pneg %p49
      %s171 = sadd.s32 %s17, %s18
      %p172 = scmp.lt.s32.totalorder %s171, 1
      %s173 = scalar_select %p172, %s171, 1
      %p174 = scmp.lt.s32.totalorder %s173, 1
      %s175 = scalar_select %p174, %s173, 1
      %s176 = smul.addr %s175, 8
      %s177 = scalar_lea.vmem %s1, %s176
      %p178 = pneg %p84
      %p179 = pneg %p81
      %p180 = pneg %p110
      %p181 = pneg %p107
      %p182 = scmp.lt.s32.totalorder %s17, 1
      %s183 = scalar_select %p182, %s17, 1
      %s184 = scalar_lea.vmem %s2, %s183
      %s185 = sadd.s32 %s17, %s18
      %p186 = scmp.lt.s32.totalorder %s185, 1
      %s187 = scalar_select %p186, %s185, 1
      %p188 = scmp.lt.s32.totalorder %s187, 1
      %s189 = scalar_select %p188, %s187, 1
      %s190 = smul.addr %s189, 8
      %s191 = scalar_lea.vmem %s0, %s190
      %s192 = sadd.s32 %s17, %s18
      %p193 = scmp.lt.s32.totalorder %s192, 1
      %s194 = scalar_select %p193, %s192, 1
      %s195 = sadd.s32 %s17, %s18
      %p196 = scmp.lt.s32.totalorder %s195, 1
      %s197 = scalar_select %p196, %s195, 1
      %p198 = scmp.lt.s32.totalorder %s197, 1
      %s199 = scalar_select %p198, %s197, 1
      %s200 = smul.addr %s199, 8
      %s201 = scalar_lea.vmem %s1, %s200
      %s202 = sadd.s32 %s17, %s18
      %p203 = scmp.lt.s32.totalorder %s202, 1
      %s204 = scalar_select %p203, %s202, 1
      %p205 = scmp.lt.s32.totalorder %s17, 1
      %s206 = scalar_select %p205, %s17, 1
      %s207 = scalar_lea.vmem %s2, %s206
      %p208 = scmp.eq.s32.totalorder %s18, 0
      // Predicated region
      $region29: #{tpu_custom_call.1} parent=27 // pred_check
        %p209 = pneg %p208
      $region30: #{tpu_custom_call.1} parent=27 // pred_check_branch
        %211 = sbr.rel (%p209) target = $region32
      $region31: #{tpu_custom_call.1} parent=27 // pred_region
        %vm212 = vcmask 7168
        %213 = vst.msk [vmem:[#allocation2] sm:$0xff] %vm212, 0.0
      $region32: #{tpu_custom_call.1} parent=27 // pred_fallthru
        _
      %v214 = vld [vmem:[%s191] sm:$0xff]
      %v215 = vld [vmem:[%s201] sm:$0xff]
      %vm216 = vcmask 130048
      %v217 = vsel %vm216, %v214, -inf
      %218 = vmax.xlane.f32.xlu0 %v217
      %v219 = vpop.xlane.xlu0 %218
      %v220 = vsub.f32 %v214, %v219
      %v221 = vmul.f32 %v220, 1.442695
      %v222 = vpow.pop %v221
      %v223 = vsel %vm216, %v222, 0.0
      %224 = vadd.xlane.f32.xlu0 %v223
      %v225 = vpop.xlane.xlu0 %224
      %v226 = vlog2.pop %v225
      %v227 = vmul.f32 %v226, 0.6931472
      %v228 = vsel %vm216, %v214, 0.0
      %229 = vadd.xlane.f32.xlu0 %v228
      %v230 = vpop.xlane.xlu0 %229
      %vm231 = vcmp.eq.s32.totalorder %v215, 4294967196
      %v232 = vsel %vm231, 0, %v215
      %v233 = vlaneseq
      %v234 = vand.u32 %v233, 127
      %235 = vset.pattern.permute.xlu0 0
      %236 = vperm.xlu0 %235, %v232
      %v237 = vpop.permute.xlu0 %236
      %vm238 = vcmp.eq.s32.totalorder %v234, %v237
      %v239 = vsel %vm238, %v214, 0.0
      %v240 = vsel %vm216, %v239, 0.0
      %241 = vadd.xlane.f32.xlu0 %v240
      %v242 = vpop.xlane.xlu0 %241
      %v243 = vadd.f32 %v219, %v227
      %v244 = vsub.f32 %v243, %v242
      %v245 = vmul.f32 %v243, 16.0
      %v246 = vsub.f32 %v245, %v230
      %v247 = vmul.f32 %v244, 0.9
      %v248 = vmul.f32 %v246, 0.00625
      %v249 = vadd.f32 %v247, %v248
      %s250 = sadd.s32 %s17, %s18
      %s251 = smul.u32 %s250, 8
      %v252 = vlaneseq
      %v253 = vshrl.u32 %v252, 7
      %vm254 = vmxor %vm231, 1
      %v255 = vstv %s251
      %v256 = vadd.s32 %v255, %v253
      %vm257 = vcmp.lt.s32.totalorder %v256, 16
      %vm258 = vmand %vm254, %vm257
      %v259 = vld [vmem:[#allocation2] sm:$0xff]
      %v260 = vsel %vm258, %v249, 0.0
      %v261 = vadd.f32 %v259, %v260
      %vm262 = vcmask 7168
      %263 = vst.msk [vmem:[#allocation2] sm:$0xff] %vm262, %v261
      // Predicated region
      $region33: #{tpu_custom_call.1} parent=27 // pred_check
        %p264 = pneg %p208
      $region34: #{tpu_custom_call.1} parent=27 // pred_check_branch
        %266 = sbr.rel (%p264) target = $region36
      $region35: #{tpu_custom_call.1} parent=27 // pred_region
        %v267 = vld [vmem:[#allocation2] sm:$0xff]
        %v268 = vsel %vm262, %v267, 0.0
        %v269 = vrot.slane %v268, 4
        %v270 = vadd.f32 %v268, %v269
        %v271 = vrot.slane %v270, 2
        %v272 = vadd.f32 %v270, %v271
        %v273 = vrot.slane %v272, 1
        %v274 = vadd.f32 %v272, %v273
        %vm275 = vcmask 0
        %276 = vst.msk [vmem:[%s207] sm:$0x1] %vm275, %v274
      $region36: #{tpu_custom_call.1} parent=27 // pred_fallthru
        _
      %p277 = scmp.lt.s32.totalorder %s17, 1
      %s278 = scalar_select %p277, %s17, 1
      %s279 = scalar_lea.vmem %s2, %s278
      // Predicated region
      $region37: #{tpu_custom_call.1} parent=27 // pred_check
        %p280 = pneg %p107
      $region38: #{tpu_custom_call.1} parent=27 // pred_check_branch
        %282 = sbr.rel (%p280) target = $region40
      $region39: #{tpu_custom_call.1} parent=27 // pred_region
        _
      $region40: #{tpu_custom_call.1} parent=27 // pred_fallthru
        _
    $region28: #{tpu_custom_call.1} parent=5 // pred_fallthru
      _
    %p283 = scmp.le.s32.totalorder 2, %s8
    // Predicated region
    $region41: #{tpu_custom_call.1} parent=5 // pred_check
      %p284 = pneg %p283
    $region42: #{tpu_custom_call.1} parent=5 // pred_check_branch
      %286 = sbr.rel (%p284) target = $region44
    $region43: #{tpu_custom_call.1} parent=5 // pred_region
      %s287 = ssub.s32 %s8, 2
      // Predicated region
      $region45: #{tpu_custom_call.1} parent=43 // pred_check
        %p288 = pneg %p113
      $region46: #{tpu_custom_call.1} parent=43 // pred_check_branch
        %290 = sbr.rel (%p288) target = $region48
      $region47: #{tpu_custom_call.1} parent=43 // pred_region
        %p291 = scmp.lt.s32.totalorder %s19, 1
        %s292 = scalar_select %p291, %s19, 1
        %s293 = scalar_lea.vmem %s2, %s292
      $region48: #{tpu_custom_call.1} parent=43 // pred_fallthru
        _
    $region44: #{tpu_custom_call.1} parent=5 // pred_fallthru
      _
  $region6: #{tpu_custom_call.1} parent=0 // loop_footer
    %s12 = sadd.s32 1, %s8
  $region7: #{tpu_custom_call.1} parent=0 // loop_footer_branch
    %7 = sbr.rel target = $region3
  $region8: #{tpu_custom_call.1} parent=0 // loop_exit
    _

</llo_original>
